<compile_context>
chip_gen: v5e
topology: v5e:2x2
jax: 0.10.0
libtpu: 0.0.40
codegen_flags: <defaults>
</compile_context>

<pallas_src>
import math

import jax
import jax.numpy as jnp
from jax import lax
from jax.experimental import pallas as pl
from jax.experimental.pallas import tpu as pltpu


def _gelu_exact(x):
    # exact GELU (erf form), matching torch.nn.GELU() default
    return 0.5 * x * (1.0 + lax.erf(x * (1.0 / math.sqrt(2.0))))


def _round_up(n, m):
    return ((n + m - 1) // m) * m


def _cdiv(a, b):
    return (a + b - 1) // b


def _pad_to(a, shape):
    # No-op (no extra HBM copy) when the array is already the right shape, so
    # callers on a hot path can pre-pad weights once outside the loop.
    if tuple(a.shape) == tuple(shape):
        return a
    return jnp.pad(a, [(0, t - s) for s, t in zip(a.shape, shape)])


def _vmem_capacity_bytes():
    try:
        info = pltpu.get_tpu_info()
        cap = getattr(info, "vmem_capacity_bytes", None)
        if cap:
            return int(cap)
    except Exception:
        pass
    return 64 * 1024 * 1024  # conservative fallback (v7x-sized VMEM)


def _make_resident_kernel(chunks):
    # chunks: list of (start, width) static slices of the padded F dimension.
    def kernel(x_ref, w0_ref, b0_ref, w1_ref, b1_ref, o_ref):
        x = x_ref[...]
        acc = jnp.zeros((x.shape[0], w1_ref.shape[1]), jnp.float32)
        for fs, fw in chunks:
            h = jnp.dot(x, w0_ref[:, fs:fs + fw],
                        preferred_element_type=jnp.float32)
            h = _gelu_exact(h + b0_ref[:, fs:fs + fw].astype(jnp.float32))
            acc = acc + jnp.dot(h.astype(w1_ref.dtype), w1_ref[fs:fs + fw, :],
                                preferred_element_type=jnp.float32)
        o_ref[...] = (acc + b1_ref[...].astype(jnp.float32)).astype(o_ref.dtype)
    return kernel


def _ftiled_kernel(x_ref, w0_ref, b0_ref, w1_ref, b1_ref, o_ref, acc_ref):
    # Streams (Hp,tf)/(tf,Hp) weight chunks along a trailing "arbitrary" axis,
    # accumulating the second matmul into a resident (tm,Hp) f32 scratch.
    k = pl.program_id(1)

    @pl.when(k == 0)
    def _():
        acc_ref[...] = jnp.zeros_like(acc_ref)

    h = jnp.dot(x_ref[...], w0_ref[...], preferred_element_type=jnp.float32)
    h = _gelu_exact(h + b0_ref[...].astype(jnp.float32))
    acc_ref[...] += jnp.dot(h.astype(w1_ref.dtype), w1_ref[...],
                            preferred_element_type=jnp.float32)

    @pl.when(k == pl.num_programs(1) - 1)
    def _():
        o_ref[...] = (acc_ref[...] +
                      b1_ref[...].astype(jnp.float32)).astype(o_ref.dtype)


def mlp_block(x, w0, b0, w1, b1, *, tm=None, f_chunk=512, tf=512,
              force_ftiled=False, vmem_limit_bytes=None,
              single_buffer_weights=True):
    """x: (B,S,H).  w0: (H,F), b0: (F,), w1: (F,H), b1: (H,).  Returns (B,S,H)."""
    B, S, H = x.shape
    Hw, F = w0.shape
    assert Hw == H and w1.shape == (F, H) and b0.shape == (F,) and b1.shape == (H,)
    M = B * S
    itemsize = x.dtype.itemsize

    cap = _vmem_capacity_bytes()
    if vmem_limit_bytes is None:
        # ~52 MiB on v7x (64 MiB VMEM), ~104 MiB on v5e/v6e (128 MiB VMEM):
        # leaves headroom for Mosaic internal scratch and the pipeline buffers.
        vmem_limit_bytes = (cap * 13) // 16
    if tm is None:
        tm = 512 if cap >= 96 * 1024 * 1024 else 256

    # Lane-align H to 128.
    H_p = _round_up(H, 128)

    # Pick the resident-weight path when both (single-buffered) weight matrices
    # comfortably fit in VMEM; otherwise stream F-chunks of the weights.
    F_128 = _round_up(F, 128)
    resident_bytes = 2 * H_p * F_128 * itemsize
    resident_budget = (cap * 5) // 8           # ~40 MiB v7x / ~80 MiB v5e/v6e
    use_ftiled = force_ftiled or (resident_bytes > resident_budget)

    tf = max(128, _round_up(min(tf, F_128), 128))
    F_p = _round_up(F, tf) if use_ftiled else F_128

    # Sublane-aligned row tile (8 for f32, 16 for bf16, 32 for int8/fp8); for
    # small M split into >=2 row tiles so v7x's two TensorCores both get work.
    sub = 8 * max(1, 4 // itemsize)
    tm_req = _round_up(min(tm, max(M, 1)), sub)
    if M >= 2 * tm_req:
        tm_eff = tm_req
    elif M > sub:
        tm_eff = _round_up(_cdiv(M, 2), sub)
    else:
        tm_eff = sub
    M_p = _round_up(M, tm_eff)

    x2 = _pad_to(x.reshape(M, H), (M_p, H_p))
    w0_p = _pad_to(w0, (H_p, F_p))
    b0_p = _pad_to(b0.reshape(1, F), (1, F_p))
    w1_p = _pad_to(w1, (F_p, H_p))
    b1_p = _pad_to(b1.reshape(1, H), (1, H_p))

    # Single-buffer the constant-index (resident) operands: their index_maps
    # never change, so one VMEM copy is enough; halves weight residency.
    single = pl.Buffered(buffer_count=1) if single_buffer_weights else None

    cost = pl.CostEstimate(
        flops=4 * M_p * H_p * F_p,            # two matmuls: 2*M*H*F each
        transcendentals=M_p * F_p,            # erf inside GELU
        bytes_accessed=(x2.size * x2.dtype.itemsize
                        + w0_p.size * w0_p.dtype.itemsize
                        + w1_p.size * w1_p.dtype.itemsize
                        + b0_p.size * b0_p.dtype.itemsize
                        + b1_p.size * b1_p.dtype.itemsize
                        + M_p * H_p * x.dtype.itemsize),
    )

    if not use_ftiled:
        # Resident-weight path with in-body F chunking (GELU/MXU overlap).
        fc = max(128, min(_round_up(f_chunk, 128), F_p))
        chunks = [(s, min(fc, F_p - s)) for s in range(0, F_p, fc)]
        grid = (M_p // tm_eff,)
        out2 = pl.pallas_call(
            _make_resident_kernel(chunks),
            out_shape=jax.ShapeDtypeStruct((M_p, H_p), x.dtype),
            grid_spec=pltpu.PrefetchScalarGridSpec(
                num_scalar_prefetch=0,
                grid=grid,
                in_specs=[
                    pl.BlockSpec((tm_eff, H_p), lambda i: (i, 0)),      # x tile
                    pl.BlockSpec((H_p, F_p), lambda i: (0, 0),
                                 pipeline_mode=single),                 # W0
                    pl.BlockSpec((1, F_p), lambda i: (0, 0),
                                 pipeline_mode=single),                 # b0
                    pl.BlockSpec((F_p, H_p), lambda i: (0, 0),
                                 pipeline_mode=single),                 # W1
                    pl.BlockSpec((1, H_p), lambda i: (0, 0),
                                 pipeline_mode=single),                 # b1
                ],
                out_specs=pl.BlockSpec((tm_eff, H_p), lambda i: (i, 0)),
            ),
            compiler_params=pltpu.CompilerParams(
                dimension_semantics=("parallel",),
                vmem_limit_bytes=vmem_limit_bytes,
            ),
            cost_estimate=cost,
        )(x2, w0_p, b0_p, w1_p, b1_p)
    else:
        # F-tiled streaming path: weights streamed behind MXU work via the
        # BlockSpec pipeline; output accumulated in a resident f32 scratch.
        grid = (M_p // tm_eff, F_p // tf)
        out2 = pl.pallas_call(
            _ftiled_kernel,
            out_shape=jax.ShapeDtypeStruct((M_p, H_p), x.dtype),
            grid_spec=pltpu.PrefetchScalarGridSpec(
                num_scalar_prefetch=0,
                grid=grid,
                in_specs=[
                    pl.BlockSpec((tm_eff, H_p), lambda i, k: (i, 0)),   # x tile
                    pl.BlockSpec((H_p, tf), lambda i, k: (0, k)),       # W0 chunk
                    pl.BlockSpec((1, tf), lambda i, k: (0, k)),         # b0 chunk
                    pl.BlockSpec((tf, H_p), lambda i, k: (k, 0)),       # W1 chunk
                    pl.BlockSpec((1, H_p), lambda i, k: (0, 0),
                                 pipeline_mode=single),                 # b1
                ],
                out_specs=pl.BlockSpec((tm_eff, H_p), lambda i, k: (i, 0)),
                scratch_shapes=[pltpu.VMEM((tm_eff, H_p), jnp.float32)],
            ),
            compiler_params=pltpu.CompilerParams(
                dimension_semantics=("parallel", "arbitrary"),
                vmem_limit_bytes=vmem_limit_bytes,
            ),
            cost_estimate=cost,
        )(x2, w0_p, b0_p, w1_p, b1_p)

    return out2[:M, :H].reshape(B, S, H)


def mlp_block_ref(x, w0, b0, w1, b1):
    h = jnp.einsum("bsh,hf->bsf", x.astype(jnp.float32), w0.astype(jnp.float32))
    h = _gelu_exact(h + b0.astype(jnp.float32))
    y = jnp.einsum("bsf,fh->bsh", h, w1.astype(jnp.float32)) + b1.astype(jnp.float32)
    return y.astype(x.dtype)


def _make_params(key, H, F, dtype=jnp.float32):
    k0, kb0, k1, kb1 = jax.random.split(key, 4)
    # torch layout: fc0.weight is (F,H), fc1.weight is (H,F); store transposed
    # so the kernel computes x @ W == torch's x @ W^T.
    w0_t = jax.random.normal(k0, (F, H), dtype=jnp.float32) * 0.05
    b0 = jax.random.normal(kb0, (F,), dtype=jnp.float32) * 0.05
    w1_t = jax.random.normal(k1, (H, F), dtype=jnp.float32) * 0.05
    b1 = jax.random.normal(kb1, (H,), dtype=jnp.float32) * 0.05
    return (w0_t.T.astype(dtype), b0.astype(dtype),
            w1_t.T.astype(dtype), b1.astype(dtype))


def _run_checks(single_buffer_weights):
    key = jax.random.PRNGKey(0)
    kx, kp, kx2, kp2 = jax.random.split(key, 4)

    # 1) f32, resident-weight path (batch=2, seq=8, hidden_dim=32, ff_dim=64).
    B, S, H, F = 2, 8, 32, 64
    x = jax.random.normal(kx, (B, S, H), dtype=jnp.float32)
    w0, b0, w1, b1 = _make_params(kp, H, F)
    out = jax.block_until_ready(
        mlp_block(x, w0, b0, w1, b1, single_buffer_weights=single_buffer_weights))
    ref = mlp_block_ref(x, w0, b0, w1, b1)
    assert out.shape == (B, S, H)
    assert jnp.allclose(out, ref, atol=1e-5, rtol=1e-5), "f32 resident path mismatch"

    # 2) bf16, resident path (native-dtype MXU feed, f32 accumulation).
    xb = x.astype(jnp.bfloat16)
    w0b, b0b, w1b, b1b = (a.astype(jnp.bfloat16) for a in (w0, b0, w1, b1))
    out_b = jax.block_until_ready(
        mlp_block(xb, w0b, b0b, w1b, b1b, single_buffer_weights=single_buffer_weights))
    assert out_b.shape == (B, S, H)
    assert jnp.allclose(out_b.astype(jnp.float32), ref, atol=5e-2, rtol=5e-2), \
        "bf16 resident path mismatch"

    # 3) f32, forced F-tiled streaming path with 2 F-steps (exercises the
    #    pl.when init/accumulate/finalize accumulator used for large weights).
    B2, S2, H2, F2 = 2, 8, 32, 256
    x2 = jax.random.normal(kx2, (B2, S2, H2), dtype=jnp.float32)
    w0s, b0s, w1s, b1s = _make_params(kp2, H2, F2)
    out_s = jax.block_until_ready(
        mlp_block(x2, w0s, b0s, w1s, b1s, force_ftiled=True, tf=128,
                  single_buffer_weights=single_buffer_weights))
    ref_s = mlp_block_ref(x2, w0s, b0s, w1s, b1s)
    assert out_s.shape == (B2, S2, H2)
    assert jnp.allclose(out_s, ref_s, atol=1e-5, rtol=1e-5), "F-tiled path mismatch"


if __name__ == "__main__":
    # TODO(synk): MaskLinear's is_reengineering weight-mask hooks are not modeled;
    # this implements the plain Linear->GELU->Linear forward the module computes.
    try:
        _run_checks(single_buffer_weights=True)
    except AssertionError:
        raise
    except Exception:
        # Fallback for jax builds that reject pl.Buffered as a pipeline_mode on
        # top-level pallas_call operands; default double buffering is
        # functionally identical (just uses a bit more VMEM).
        _run_checks(single_buffer_weights=False)
    print("KERNEL_OK")
</pallas_src>

<mosaic_0001>
module attributes {stable_mosaic.version = 11 : i64} {
  func.func @kernel(%arg0: i32, %arg1: memref<8x128xf32, #tpu.memory_space<vmem>>, %arg2: memref<128x128xf32, #tpu.memory_space<vmem>>, %arg3: memref<1x128xf32, #tpu.memory_space<vmem>>, %arg4: memref<128x128xf32, #tpu.memory_space<vmem>>, %arg5: memref<1x128xf32, #tpu.memory_space<vmem>>, %arg6: memref<8x128xf32, #tpu.memory_space<vmem>>) attributes {dimension_semantics = [#tpu.dimension_semantics<parallel>], iteration_bounds = array<i64: 2>, scalar_prefetch = 0 : i64, scratch_operands = 0 : i64, tpu.core_type = #tpu.core_type<tc>, window_params = [{transform_indices = @transform_0, window_bounds = array<i64: 8, 128>}, {pipeline_mode = #tpu.pipeline_mode<synchronous>, transform_indices = @transform_1, window_bounds = array<i64: 128, 128>}, {pipeline_mode = #tpu.pipeline_mode<synchronous>, transform_indices = @transform_2, window_bounds = array<i64: 1, 128>}, {pipeline_mode = #tpu.pipeline_mode<synchronous>, transform_indices = @transform_3, window_bounds = array<i64: 128, 128>}, {pipeline_mode = #tpu.pipeline_mode<synchronous>, transform_indices = @transform_4, window_bounds = array<i64: 1, 128>}, {transform_indices = @transform_5, window_bounds = array<i64: 8, 128>}]} {
    %c0 = arith.constant 0 : index
    %c0_0 = arith.constant 0 : index
    %0 = vector.load %arg1[%c0, %c0_0] : memref<8x128xf32, #tpu.memory_space<vmem>>, vector<8x128xf32>
    %cst = arith.constant 0.000000e+00 : f32
    %1 = vector.broadcast %cst : f32 to vector<8x128xf32>
    %c0_1 = arith.constant 0 : index
    %c0_2 = arith.constant 0 : index
    %2 = vector.load %arg2[%c0_1, %c0_2] : memref<128x128xf32, #tpu.memory_space<vmem>>, vector<128x128xf32>
    %cst_3 = arith.constant dense<0.000000e+00> : vector<8x128xf32>
    %3 = tpu.matmul %0, %2, %cst_3 {dimension_numbers = #tpu.dot_dimension_numbers<[1], [0], [0], [1], [0, 0, 1, 1], [], []>} : vector<8x128xf32>, vector<128x128xf32>, vector<8x128xf32> -> vector<8x128xf32>
    %c0_4 = arith.constant 0 : index
    %c0_5 = arith.constant 0 : index
    %4 = vector.load %arg3[%c0_4, %c0_5] : memref<1x128xf32, #tpu.memory_space<vmem>>, vector<1x128xf32>
    %5 = vector.broadcast %4 : vector<1x128xf32> to vector<8x128xf32>
    %6 = arith.addf %3, %5 : vector<8x128xf32>
    %cst_6 = arith.constant 5.000000e-01 : f32
    %7 = vector.broadcast %cst_6 : f32 to vector<8x128xf32>
    %8 = arith.mulf %7, %6 : vector<8x128xf32>
    %cst_7 = arith.constant 0.707106769 : f32
    %9 = vector.broadcast %cst_7 : f32 to vector<8x128xf32>
    %10 = arith.mulf %6, %9 : vector<8x128xf32>
    %11 = math.erf %10 : vector<8x128xf32>
    %cst_8 = arith.constant 1.000000e+00 : f32
    %12 = vector.broadcast %cst_8 : f32 to vector<8x128xf32>
    %13 = arith.addf %12, %11 : vector<8x128xf32>
    %14 = arith.mulf %8, %13 : vector<8x128xf32>
    %c0_9 = arith.constant 0 : index
    %c0_10 = arith.constant 0 : index
    %15 = vector.load %arg4[%c0_9, %c0_10] : memref<128x128xf32, #tpu.memory_space<vmem>>, vector<128x128xf32>
    %cst_11 = arith.constant dense<0.000000e+00> : vector<8x128xf32>
    %16 = tpu.matmul %14, %15, %cst_11 {dimension_numbers = #tpu.dot_dimension_numbers<[1], [0], [0], [1], [0, 0, 1, 1], [], []>} : vector<8x128xf32>, vector<128x128xf32>, vector<8x128xf32> -> vector<8x128xf32>
    %17 = arith.addf %1, %16 : vector<8x128xf32>
    %c0_12 = arith.constant 0 : index
    %c0_13 = arith.constant 0 : index
    %18 = vector.load %arg5[%c0_12, %c0_13] : memref<1x128xf32, #tpu.memory_space<vmem>>, vector<1x128xf32>
    %19 = vector.broadcast %18 : vector<1x128xf32> to vector<8x128xf32>
    %20 = arith.addf %17, %19 : vector<8x128xf32>
    %c0_14 = arith.constant 0 : index
    %c0_15 = arith.constant 0 : index
    %21 = vector.load %arg6[%c0_14, %c0_15] : memref<8x128xf32, #tpu.memory_space<vmem>>, vector<8x128xf32>
    tpu.vector_store %arg6[%c0_14, %c0_15], %20 {strides = array<i32>} : memref<8x128xf32, #tpu.memory_space<vmem>>, vector<8x128xf32>,
    return
  }
  func.func @transform_0(%arg0: i32) -> (i32, i32) {
    %c0_i32 = arith.constant 0 : i32
    %c0_i32_0 = arith.constant 0 : i32
    return %arg0, %c0_i32 : i32, i32
  }
  func.func @transform_1(%arg0: i32) -> (i32, i32) {
    %c0_i32 = arith.constant 0 : i32
    %c0_i32_0 = arith.constant 0 : i32
    %c0_i32_1 = arith.constant 0 : i32
    return %c0_i32, %c0_i32_0 : i32, i32
  }
  func.func @transform_2(%arg0: i32) -> (i32, i32) {
    %c0_i32 = arith.constant 0 : i32
    %c0_i32_0 = arith.constant 0 : i32
    %c0_i32_1 = arith.constant 0 : i32
    return %c0_i32, %c0_i32_0 : i32, i32
  }
  func.func @transform_3(%arg0: i32) -> (i32, i32) {
    %c0_i32 = arith.constant 0 : i32
    %c0_i32_0 = arith.constant 0 : i32
    %c0_i32_1 = arith.constant 0 : i32
    return %c0_i32, %c0_i32_0 : i32, i32
  }
  func.func @transform_4(%arg0: i32) -> (i32, i32) {
    %c0_i32 = arith.constant 0 : i32
    %c0_i32_0 = arith.constant 0 : i32
    %c0_i32_1 = arith.constant 0 : i32
    return %c0_i32, %c0_i32_0 : i32, i32
  }
  func.func @transform_5(%arg0: i32) -> (i32, i32) {
    %c0_i32 = arith.constant 0 : i32
    %c0_i32_0 = arith.constant 0 : i32
    return %arg0, %c0_i32 : i32, i32
  }
}

module attributes {stable_mosaic.version = 11 : i64} {
  func.func @kernel(%arg0: i32, %arg1: memref<8x128xf32, #tpu.memory_space<vmem>>, %arg2: memref<128x128xf32, #tpu.memory_space<vmem>>, %arg3: memref<1x128xf32, #tpu.memory_space<vmem>>, %arg4: memref<128x128xf32, #tpu.memory_space<vmem>>, %arg5: memref<1x128xf32, #tpu.memory_space<vmem>>, %arg6: memref<8x128xf32, #tpu.memory_space<vmem>>) attributes {dimension_semantics = [#tpu.dimension_semantics<parallel>], iteration_bounds = array<i64: 2>, scalar_prefetch = 0 : i64, scratch_operands = 0 : i64, tpu.core_type = #tpu.core_type<tc>, window_params = [{transform_indices = @transform_0, window_bounds = array<i64: 8, 128>}, {pipeline_mode = #tpu.pipeline_mode<synchronous>, transform_indices = @transform_1, window_bounds = array<i64: 128, 128>}, {pipeline_mode = #tpu.pipeline_mode<synchronous>, transform_indices = @transform_2, window_bounds = array<i64: 1, 128>}, {pipeline_mode = #tpu.pipeline_mode<synchronous>, transform_indices = @transform_3, window_bounds = array<i64: 128, 128>}, {pipeline_mode = #tpu.pipeline_mode<synchronous>, transform_indices = @transform_4, window_bounds = array<i64: 1, 128>}, {transform_indices = @transform_5, window_bounds = array<i64: 8, 128>}]} {
    %c0 = arith.constant 0 : index
    %c0_0 = arith.constant 0 : index
    %0 = vector.load %arg1[%c0, %c0_0] : memref<8x128xf32, #tpu.memory_space<vmem>>, vector<8x128xf32>
    %cst = arith.constant 0.000000e+00 : f32
    %1 = vector.broadcast %cst : f32 to vector<8x128xf32>
    %c0_1 = arith.constant 0 : index
    %c0_2 = arith.constant 0 : index
    %2 = vector.load %arg2[%c0_1, %c0_2] : memref<128x128xf32, #tpu.memory_space<vmem>>, vector<128x128xf32>
    %cst_3 = arith.constant dense<0.000000e+00> : vector<8x128xf32>
    %3 = tpu.matmul %0, %2, %cst_3 {dimension_numbers = #tpu.dot_dimension_numbers<[1], [0], [0], [1], [0, 0, 1, 1], [], []>} : vector<8x128xf32>, vector<128x128xf32>, vector<8x128xf32> -> vector<8x128xf32>
    %c0_4 = arith.constant 0 : index
    %c0_5 = arith.constant 0 : index
    %4 = vector.load %arg3[%c0_4, %c0_5] : memref<1x128xf32, #tpu.memory_space<vmem>>, vector<1x128xf32>
    %5 = vector.broadcast %4 : vector<1x128xf32> to vector<8x128xf32>
    %6 = arith.addf %3, %5 : vector<8x128xf32>
    %cst_6 = arith.constant 5.000000e-01 : f32
    %7 = vector.broadcast %cst_6 : f32 to vector<8x128xf32>
    %8 = arith.mulf %7, %6 : vector<8x128xf32>
    %cst_7 = arith.constant 0.707106769 : f32
    %9 = vector.broadcast %cst_7 : f32 to vector<8x128xf32>
    %10 = arith.mulf %6, %9 : vector<8x128xf32>
    %11 = math.erf %10 : vector<8x128xf32>
    %cst_8 = arith.constant 1.000000e+00 : f32
    %12 = vector.broadcast %cst_8 : f32 to vector<8x128xf32>
    %13 = arith.addf %12, %11 : vector<8x128xf32>
    %14 = arith.mulf %8, %13 : vector<8x128xf32>
    %c0_9 = arith.constant 0 : index
    %c0_10 = arith.constant 0 : index
    %15 = vector.load %arg4[%c0_9, %c0_10] : memref<128x128xf32, #tpu.memory_space<vmem>>, vector<128x128xf32>
    %cst_11 = arith.constant dense<0.000000e+00> : vector<8x128xf32>
    %16 = tpu.matmul %14, %15, %cst_11 {dimension_numbers = #tpu.dot_dimension_numbers<[1], [0], [0], [1], [0, 0, 1, 1], [], []>} : vector<8x128xf32>, vector<128x128xf32>, vector<8x128xf32> -> vector<8x128xf32>
    %17 = arith.addf %1, %16 : vector<8x128xf32>
    %c0_12 = arith.constant 0 : index
    %c0_13 = arith.constant 0 : index
    %18 = vector.load %arg5[%c0_12, %c0_13] : memref<1x128xf32, #tpu.memory_space<vmem>>, vector<1x128xf32>
    %19 = vector.broadcast %18 : vector<1x128xf32> to vector<8x128xf32>
    %20 = arith.addf %17, %19 : vector<8x128xf32>
    %c0_14 = arith.constant 0 : index
    %c0_15 = arith.constant 0 : index
    %21 = vector.load %arg6[%c0_14, %c0_15] : memref<8x128xf32, #tpu.memory_space<vmem>>, vector<8x128xf32>
    tpu.vector_store %arg6[%c0_14, %c0_15], %20 {strides = array<i32>} : memref<8x128xf32, #tpu.memory_space<vmem>>, vector<8x128xf32>,
    return
  }
  func.func @transform_0(%arg0: i32) -> (i32, i32) {
    %c0_i32 = arith.constant 0 : i32
    %c0_i32_0 = arith.constant 0 : i32
    return %arg0, %c0_i32 : i32, i32
  }
  func.func @transform_1(%arg0: i32) -> (i32, i32) {
    %c0_i32 = arith.constant 0 : i32
    %c0_i32_0 = arith.constant 0 : i32
    %c0_i32_1 = arith.constant 0 : i32
    return %c0_i32, %c0_i32_0 : i32, i32
  }
  func.func @transform_2(%arg0: i32) -> (i32, i32) {
    %c0_i32 = arith.constant 0 : i32
    %c0_i32_0 = arith.constant 0 : i32
    %c0_i32_1 = arith.constant 0 : i32
    return %c0_i32, %c0_i32_0 : i32, i32
  }
  func.func @transform_3(%arg0: i32) -> (i32, i32) {
    %c0_i32 = arith.constant 0 : i32
    %c0_i32_0 = arith.constant 0 : i32
    %c0_i32_1 = arith.constant 0 : i32
    return %c0_i32, %c0_i32_0 : i32, i32
  }
  func.func @transform_4(%arg0: i32) -> (i32, i32) {
    %c0_i32 = arith.constant 0 : i32
    %c0_i32_0 = arith.constant 0 : i32
    %c0_i32_1 = arith.constant 0 : i32
    return %c0_i32, %c0_i32_0 : i32, i32
  }
  func.func @transform_5(%arg0: i32) -> (i32, i32) {
    %c0_i32 = arith.constant 0 : i32
    %c0_i32_0 = arith.constant 0 : i32
    return %arg0, %c0_i32 : i32, i32
  }
}

</mosaic_0001>

<llo_original>
// kernel: tpu_custom_call.1
$region0: #{tpu_custom_call.1}
  #allocation0 [shape = 'u32[]', space=smem, size = 0x4, offset = 0x4, fixed_abs, tag = 'smem constant byte address 0x4 - core index']
  #allocation1 [shape = 'u32[72,128]{1,0:T(1,128)}', space=vmem, size = 0x9000, scoped, tag = 'internal scratch']
  %s0 = inlined_call_operand.hbm [shape: f32[16,128], index: 0, kind: input, shape index: {}]
  %s1 = inlined_call_operand.hbm [shape: f32[128,128], index: 1, kind: input, shape index: {}]
  %s2 = inlined_call_operand.vmem [shape: f32[1,128], index: 2, kind: input, shape index: {}]
  %s3 = inlined_call_operand.hbm [shape: f32[128,128], index: 3, kind: input, shape index: {}]
  %s4 = inlined_call_operand.vmem [shape: f32[1,128], index: 4, kind: input, shape index: {}]
  %s5 = inlined_call_operand.hbm [shape: f32[16,128], index: 5, kind: output, shape index: {}]
  %s6 = sld [smem:[#allocation0]]
  $region65: #{tpu_custom_call.1} parent=0
    _
  %s8 = ssub.s32 1, %s6
  %s9 = scalar_select 0, %s8, %s6
  $region1: #{tpu_custom_call.1} parent=0
    #allocation2 [shape = 'u8[8192]{0}', space=vmem, size = 0x2000, scoped, tag = 'input window, operand 0']
    #allocation3 [shape = 's32[2]{0}', space=sflag, size = 0x8, scoped, tag = 'scoped memory for tpu_custom_call.1']
    #allocation4 [shape = 's32[2]{0}', space=sflag, size = 0x8, scoped, tag = 'scoped memory for tpu_custom_call.1']
    #allocation5 [shape = 'u8[65536]{0}', space=vmem, size = 0x10000, scoped, tag = 'input window, operand 1, single buffered']
    #allocation6 [shape = 's32[1]{0}', space=sflag, size = 0x4, scoped, tag = 'scoped memory for tpu_custom_call.1']
    #allocation7 [shape = 'u8[65536]{0}', space=vmem, size = 0x10000, scoped, tag = 'input window, operand 3, single buffered']
    #allocation8 [shape = 'u8[8192]{0}', space=vmem, size = 0x2000, scoped, tag = 'output window, operand 0']
    %10 = vsyncpa [#allocation3], 0
    %s11 = scalar_lea.sflag [#allocation3], 1
    %12 = vsyncpa %s11, 0
    %13 = vsyncpa [#allocation6], 0
    %14 = vsyncpa [#allocation4], 0
    %s15 = scalar_lea.sflag [#allocation4], 1
    %16 = vsyncpa %s15, 0
    loop: start=0, step=1, limit=4
    $region2: #{tpu_custom_call.1} parent=1 // loop_pre_header
      _
    $region3: #{tpu_custom_call.1} parent=1 // loop_header
      %s18 = sphi 0, %s22
      %p19 = scmp.ge.s32.totalorder %s18, 4
      %s28 = sphi 0, %s30
      %s31 = sphi 0, %s28
      %s32 = sphi 0, %s31
      %s48 = sphi 0, %s32
      %s52 = sphi 0, %s52
      %s54 = sphi 0, %s52
      %s55 = sphi 0, %s54
      %s69 = sphi 0, %s55
      %s73 = sphi 0, %s73
      %s75 = sphi 0, %s73
      %s76 = sphi 0, %s75
      %s90 = sphi 0, %s76
      %s94 = sphi 0, %s94
      %s96 = sphi 0, %s94
      %s97 = sphi 0, %s96
      %s111 = sphi 0, %s97
      %s115 = sphi 0, %s115
      %s117 = sphi 0, %s115
      %s118 = sphi 0, %s117
      %s132 = sphi 0, %s118
      %s138 = sphi 0, %s140
      %s141 = sphi 0, %s138
      %s142 = sphi 0, %s141
      %s158 = sphi 0, %s142
    $region4: #{tpu_custom_call.1} parent=1 // loop_header_branch
      %21 = sbr.rel (%p19) target = $region8
    $region5: #{tpu_custom_call.1} parent=1 // loop_body
      %s23 = ssub.s32 %s18, 1
      %s24 = ssub.s32 %s18, 2
      %s25 = sadd.s32 %s18, 1
      %s26 = ssub.s32 %s18, %s25
      %p27 = scmp.eq.s32.totalorder %s26, 0
      %s29 = sadd.s32 %s28, 1
      %s30 = scalar_select %p27, %s28, %s29
      %p33 = pneg %p27
      %p34 = scmp.eq.s32.totalorder %s18, 1
      %p35 = por %p33, %p34
      %p36 = scmp.ne.s32.totalorder %s28, %s31
      %p37 = scmp.eq.s32.totalorder %s18, 0
      %p38 = por %p36, %p37
      %p39 = scmp.ne.s32.totalorder %s28, %s31
      %p40 = scmp.eq.s32.totalorder %s23, 1
      %p41 = por %p39, %p40
      %p42 = scmp.ne.s32.totalorder %s31, %s32
      %p43 = scmp.eq.s32.totalorder %s23, 0
      %p44 = por %p42, %p43
      %p45 = scmp.ne.s32.totalorder %s31, %s32
      %p46 = scmp.eq.s32.totalorder %s24, 1
      %p47 = por %p45, %p46
      %p49 = scmp.ne.s32.totalorder %s32, %s48
      %p50 = scmp.eq.s32.totalorder %s24, 0
      %p51 = por %p49, %p50
      %s53 = sadd.s32 %s52, 1
      %p56 = scmp.eq.s32.totalorder %s18, 1
      %p57 = scmp.ne.s32.totalorder %s52, %s54
      %p58 = scmp.eq.s32.totalorder %s18, 0
      %p59 = por %p57, %p58
      %p60 = scmp.ne.s32.totalorder %s52, %s54
      %p61 = scmp.eq.s32.totalorder %s23, 1
      %p62 = por %p60, %p61
      %p63 = scmp.ne.s32.totalorder %s54, %s55
      %p64 = scmp.eq.s32.totalorder %s23, 0
      %p65 = por %p63, %p64
      %p66 = scmp.ne.s32.totalorder %s54, %s55
      %p67 = scmp.eq.s32.totalorder %s24, 1
      %p68 = por %p66, %p67
      %p70 = scmp.ne.s32.totalorder %s55, %s69
      %p71 = scmp.eq.s32.totalorder %s24, 0
      %p72 = por %p70, %p71
      %s74 = sadd.s32 %s73, 1
      %p77 = scmp.eq.s32.totalorder %s18, 1
      %p78 = scmp.ne.s32.totalorder %s73, %s75
      %p79 = scmp.eq.s32.totalorder %s18, 0
      %p80 = por %p78, %p79
      %p81 = scmp.ne.s32.totalorder %s73, %s75
      %p82 = scmp.eq.s32.totalorder %s23, 1
      %p83 = por %p81, %p82
      %p84 = scmp.ne.s32.totalorder %s75, %s76
      %p85 = scmp.eq.s32.totalorder %s23, 0
      %p86 = por %p84, %p85
      %p87 = scmp.ne.s32.totalorder %s75, %s76
      %p88 = scmp.eq.s32.totalorder %s24, 1
      %p89 = por %p87, %p88
      %p91 = scmp.ne.s32.totalorder %s76, %s90
      %p92 = scmp.eq.s32.totalorder %s24, 0
      %p93 = por %p91, %p92
      %s95 = sadd.s32 %s94, 1
      %p98 = scmp.eq.s32.totalorder %s18, 1
      %p99 = scmp.ne.s32.totalorder %s94, %s96
      %p100 = scmp.eq.s32.totalorder %s18, 0
      %p101 = por %p99, %p100
      %p102 = scmp.ne.s32.totalorder %s94, %s96
      %p103 = scmp.eq.s32.totalorder %s23, 1
      %p104 = por %p102, %p103
      %p105 = scmp.ne.s32.totalorder %s96, %s97
      %p106 = scmp.eq.s32.totalorder %s23, 0
      %p107 = por %p105, %p106
      %p108 = scmp.ne.s32.totalorder %s96, %s97
      %p109 = scmp.eq.s32.totalorder %s24, 1
      %p110 = por %p108, %p109
      %p112 = scmp.ne.s32.totalorder %s97, %s111
      %p113 = scmp.eq.s32.totalorder %s24, 0
      %p114 = por %p112, %p113
      %s116 = sadd.s32 %s115, 1
      %p119 = scmp.eq.s32.totalorder %s18, 1
      %p120 = scmp.ne.s32.totalorder %s115, %s117
      %p121 = scmp.eq.s32.totalorder %s18, 0
      %p122 = por %p120, %p121
      %p123 = scmp.ne.s32.totalorder %s115, %s117
      %p124 = scmp.eq.s32.totalorder %s23, 1
      %p125 = por %p123, %p124
      %p126 = scmp.ne.s32.totalorder %s117, %s118
      %p127 = scmp.eq.s32.totalorder %s23, 0
      %p128 = por %p126, %p127
      %p129 = scmp.ne.s32.totalorder %s117, %s118
      %p130 = scmp.eq.s32.totalorder %s24, 1
      %p131 = por %p129, %p130
      %p133 = scmp.ne.s32.totalorder %s118, %s132
      %p134 = scmp.eq.s32.totalorder %s24, 0
      %p135 = por %p133, %p134
      %s136 = ssub.s32 %s18, %s25
      %p137 = scmp.eq.s32.totalorder %s136, 0
      %s139 = sadd.s32 %s138, 1
      %s140 = scalar_select %p137, %s138, %s139
      %p143 = pneg %p137
      %p144 = scmp.eq.s32.totalorder %s18, 1
      %p145 = por %p143, %p144
      %p146 = scmp.ne.s32.totalorder %s138, %s141
      %p147 = scmp.eq.s32.totalorder %s18, 0
      %p148 = por %p146, %p147
      %p149 = scmp.ne.s32.totalorder %s138, %s141
      %p150 = scmp.eq.s32.totalorder %s23, 1
      %p151 = por %p149, %p150
      %p152 = scmp.ne.s32.totalorder %s141, %s142
      %p153 = scmp.eq.s32.totalorder %s23, 0
      %p154 = por %p152, %p153
      %p155 = scmp.ne.s32.totalorder %s141, %s142
      %p156 = scmp.eq.s32.totalorder %s24, 1
      %p157 = por %p155, %p156
      %p159 = scmp.ne.s32.totalorder %s142, %s158
      %p160 = scmp.eq.s32.totalorder %s24, 0
      %p161 = por %p159, %p160
      %p162 = scmp.le.s32.totalorder 1, %s18
      %p163 = scmp.lt.s32.totalorder %s18, 3
      %p164 = pnand %p162, %p163
      %p165 = pneg %p164
      // Predicated region
      $region9: #{tpu_custom_call.1} parent=5 // pred_check
        _
      $region10: #{tpu_custom_call.1} parent=5 // pred_check_branch
        %167 = sbr.rel (%p164) target = $region12
      $region11: #{tpu_custom_call.1} parent=5 // pred_region
        %s168 = ssub.s32 %s18, 1
        // Predicated region
        $region13: #{tpu_custom_call.1} parent=11 // pred_check
          %p169 = pneg %p65
        $region14: #{tpu_custom_call.1} parent=11 // pred_check_branch
          %171 = sbr.rel (%p169) target = $region16
        $region15: #{tpu_custom_call.1} parent=11 // pred_region
          %173 = vsyncadd [#allocation6], 0
          %s174 = sshll.u32 %s1, 4
          %s175 = int_to_ptr.hbm [resolvable:$true] %s174
          %s176 = sshll.u32 [#allocation5], 4
          %s177 = int_to_ptr.vmem [resolvable:$true] %s176
          %182 = dma.hbm_to_vmem [thread:$0]  %s175, 2048, %s177, [#allocation6], 128, 128, 8
        $region16: #{tpu_custom_call.1} parent=11 // pred_fallthru
          _
        // Predicated region
        $region17: #{tpu_custom_call.1} parent=11 // pred_check
          %p183 = pneg %p86
        $region18: #{tpu_custom_call.1} parent=11 // pred_check_branch
          %185 = sbr.rel (%p183) target = $region20
        $region19: #{tpu_custom_call.1} parent=11 // pred_region
          _
        $region20: #{tpu_custom_call.1} parent=11 // pred_fallthru
          _
        // Predicated region
        $region21: #{tpu_custom_call.1} parent=11 // pred_check
          %p186 = pneg %p107
        $region22: #{tpu_custom_call.1} parent=11 // pred_check_branch
          %188 = sbr.rel (%p186) target = $region24
        $region23: #{tpu_custom_call.1} parent=11 // pred_region
          %190 = vsyncadd [#allocation6], 0
          %s191 = sshll.u32 %s3, 4
          %s192 = int_to_ptr.hbm [resolvable:$true] %s191
          %s193 = sshll.u32 [#allocation7], 4
          %s194 = int_to_ptr.vmem [resolvable:$true] %s193
          %199 = dma.hbm_to_vmem [thread:$0]  %s192, 2048, %s194, [#allocation6], 128, 128, 8
        $region24: #{tpu_custom_call.1} parent=11 // pred_fallthru
          _
        // Predicated region
        $region25: #{tpu_custom_call.1} parent=11 // pred_check
          %p200 = pneg %p128
        $region26: #{tpu_custom_call.1} parent=11 // pred_check_branch
          %202 = sbr.rel (%p200) target = $region28
        $region27: #{tpu_custom_call.1} parent=11 // pred_region
          _
        $region28: #{tpu_custom_call.1} parent=11 // pred_fallthru
          _
      $region12: #{tpu_custom_call.1} parent=5 // pred_fallthru
        _
      %p203 = scmp.lt.s32.totalorder %s18, 2
      // Predicated region
      $region29: #{tpu_custom_call.1} parent=5 // pred_check
        %p204 = pneg %p203
      $region30: #{tpu_custom_call.1} parent=5 // pred_check_branch
        %206 = sbr.rel (%p204) target = $region32
      $region31: #{tpu_custom_call.1} parent=5 // pred_region
        // Predicated region
        $region33: #{tpu_custom_call.1} parent=31 // pred_check
          %p207 = pneg %p38
        $region34: #{tpu_custom_call.1} parent=31 // pred_check_branch
          %209 = sbr.rel (%p207) target = $region36
        $region35: #{tpu_custom_call.1} parent=31 // pred_region
          %s210 = sand.u32 %s28, 1
          %s211 = scalar_lea.sflag [#allocation3], %s210
          %s212 = sand.u32 %s28, 1
          %s213 = smul.addr %s212, 8
          %s214 = scalar_lea.vmem [#allocation2], %s213
          %216 = vsyncadd %s211, 0
          %s217 = smul.addr %s18, 8
          %s218 = scalar_lea.hbm %s0, %s217
          %s220 = sshll.u32 %s218, 4
          %s221 = int_to_ptr.hbm [resolvable:$true] %s220
          %s222 = sshll.u32 %s214, 4
          %s223 = int_to_ptr.vmem [resolvable:$true] %s222
          %225 = dma.hbm_to_vmem [thread:$0]  %s221, 128, %s223, %s211
        $region36: #{tpu_custom_call.1} parent=31 // pred_fallthru
          _
      $region32: #{tpu_custom_call.1} parent=5 // pred_fallthru
        _
      %p226 = scmp.le.s32.totalorder 1, %s18
      %p227 = scmp.lt.s32.totalorder %s18, 3
      %p228 = pnand %p226, %p227
      %p229 = pneg %p228
      // Predicated region
      $region37: #{tpu_custom_call.1} parent=5 // pred_check
        _
      $region38: #{tpu_custom_call.1} parent=5 // pred_check_branch
        %231 = sbr.rel (%p228) target = $region40
      $region39: #{tpu_custom_call.1} parent=5 // pred_region
        %s232 = ssub.s32 %s18, 1
        %s233 = sand.u32 %s31, 1
        %s234 = scalar_lea.sflag [#allocation3], %s233
        %s235 = sand.u32 %s31, 1
        %s236 = smul.addr %s235, 8
        %s237 = scalar_lea.vmem [#allocation2], %s236
        // Predicated region
        $region41: #{tpu_custom_call.1} parent=39 // pred_check
          %p238 = pneg %p44
        $region42: #{tpu_custom_call.1} parent=39 // pred_check_branch
          %240 = sbr.rel (%p238) target = $region44
        $region43: #{tpu_custom_call.1} parent=39 // pred_region
          %242 = dma.done %s234, 128
        $region44: #{tpu_custom_call.1} parent=39 // pred_fallthru
          _
        // Predicated region
        $region45: #{tpu_custom_call.1} parent=39 // pred_check
          %p243 = pneg %p65
        $region46: #{tpu_custom_call.1} parent=39 // pred_check_branch
          %245 = sbr.rel (%p243) target = $region48
        $region47: #{tpu_custom_call.1} parent=39 // pred_region
          %247 = dma.done [#allocation6], 2048
        $region48: #{tpu_custom_call.1} parent=39 // pred_fallthru
          _
        // Predicated region
        $region49: #{tpu_custom_call.1} parent=39 // pred_check
          %p248 = pneg %p107
        $region50: #{tpu_custom_call.1} parent=39 // pred_check_branch
          %250 = sbr.rel (%p248) target = $region52
        $region51: #{tpu_custom_call.1} parent=39 // pred_region
          %252 = dma.done [#allocation6], 2048
        $region52: #{tpu_custom_call.1} parent=39 // pred_fallthru
          _
        %s253 = sand.u32 %s31, 1
        %s254 = scalar_lea.sflag [#allocation3], %s253
        %s255 = sand.u32 %s31, 1
        %s256 = smul.addr %s255, 8
        %s257 = scalar_lea.vmem [#allocation2], %s256
        %p258 = pneg %p44
        %p259 = pneg %p41
        %p260 = pneg %p65
        %p261 = pneg %p62
        %p262 = pneg %p86
        %p263 = pneg %p83
        %p264 = pneg %p107
        %p265 = pneg %p104
        %p266 = pneg %p128
        %p267 = pneg %p125
        %p268 = pneg %p154
        %p269 = pneg %p151
        %s270 = sand.u32 %s141, 1
        %s271 = scalar_lea.sflag [#allocation4], %s270
        %s272 = sand.u32 %s141, 1
        %s273 = smul.addr %s272, 8
        %s274 = scalar_lea.vmem [#allocation8], %s273
        %v275 = vld [vmem:[%s237] sm:$0xff]
        %v276 = vld [vmem:[#allocation5] sm:$0xff]
        %v277 = vld [vmem:[#allocation5 + $0x8] sm:$0xff]
        %v278 = vld [vmem:[#allocation5 + $0x10] sm:$0xff]
        %v279 = vld [vmem:[#allocation5 + $0x18] sm:$0xff]
        %v280 = vld [vmem:[#allocation5 + $0x20] sm:$0xff]
        %v281 = vld [vmem:[#allocation5 + $0x28] sm:$0xff]
        %v282 = vld [vmem:[#allocation5 + $0x30] sm:$0xff]
        %v283 = vld [vmem:[#allocation5 + $0x38] sm:$0xff]
        %v284 = vld [vmem:[#allocation5 + $0x40] sm:$0xff]
        %v285 = vld [vmem:[#allocation5 + $0x48] sm:$0xff]
        %v286 = vld [vmem:[#allocation5 + $0x50] sm:$0xff]
        %v287 = vld [vmem:[#allocation5 + $0x58] sm:$0xff]
        %v288 = vld [vmem:[#allocation5 + $0x60] sm:$0xff]
        %v289 = vld [vmem:[#allocation5 + $0x68] sm:$0xff]
        %v290 = vld [vmem:[#allocation5 + $0x70] sm:$0xff]
        %v291 = vld [vmem:[#allocation5 + $0x78] sm:$0xff]
        %v292 = vld [vmem:[%s2] sm:$0x1]
        %v294 = vperm.slane %v292, 0
        %296 = vmatpush.msra.mxu0 %v291
        %297 = vmatpush.msra.mxu0 %v290
        %298 = vmatpush.msra.mxu0 %v289
        %299 = vmatpush.msra.mxu0 %v288
        %300 = vmatpush.msra.mxu0 %v287
        %301 = vmatpush.msra.mxu0 %v286
        %302 = vmatpush.msra.mxu0 %v285
        %303 = vmatpush.msra.mxu0 %v284
        %304 = vmatpush.msra.mxu0 %v283
        %305 = vmatpush.msra.mxu0 %v282
        %306 = vmatpush.msra.mxu0 %v281
        %307 = vmatpush.msra.mxu0 %v280
        %308 = vmatpush.msra.mxu0 %v279
        %309 = vmatpush.msra.mxu0 %v278
        %310 = vmatpush.msra.mxu0 %v277
        %311 = vmatpush.msra.mxu0 %v276
        %312 = vmatmul.f32.gmra.mxu0 %v275
        %v313 = vpop.f32.mrf.mxu0
        %v314 = vadd.f32 %v294, %v313
        %315 = vdwg.mxu0
        %v316 = vmul.f32 %v314, 0.5
        %v317 = vmul.f32 %v314, 0.70710677
        %v318 = vmul.f32 %v317, %v317
        %v319 = vmin.f32 16.0, %v318
        %v320 = vmul.f32 %v319, 2.1237322e-06
        %v321 = vadd.f32 %v320, 0.00028619796
        %v322 = vmul.f32 %v319, %v321
        %v323 = vadd.f32 %v322, 0.0036580483
        %v324 = vmul.f32 %v319, %v323
        %v325 = vadd.f32 %v324, 0.05243302
        %v326 = vmul.f32 %v319, %v325
        %v327 = vadd.f32 %v326, 0.18741608
        %v328 = vmul.f32 %v319, %v327
        %v329 = vadd.f32 %v328, 1.1283791
        %v330 = vmul.f32 %v317, %v329
        %v331 = vmul.f32 %v319, 3.8918573e-05
        %v332 = vadd.f32 %v331, 0.001143296
        %v333 = vmul.f32 %v319, %v332
        %v334 = vadd.f32 %v333, 0.014752088
        %v335 = vmul.f32 %v319, %v334
        %v336 = vadd.f32 %v335, 0.112945676
        %v337 = vmul.f32 %v319, %v336
        %v338 = vadd.f32 %v337, 0.4994258
        %v339 = vmul.f32 %v319, %v338
        %v340 = vadd.f32 %v339, 1.0
        %v341 = vrcp.pop %v340
        %v342 = vmul.f32 %v340, %v341
        %v343 = vsub.f32 1.0, %v342
        %v344 = vmul.f32 %v341, %v343
        %v345 = vadd.f32 %v341, %v344
        %vm346 = vweird.f32 %v340
        %vm347 = vweird.f32 %v341
        %vm348 = vmor %vm346, %vm347
        %v349 = vsel %vm348, %v341, %v345
        %v350 = vand.u32 2147483647, %v340
        %vm351 = vcmp.eq.f32.partialorder %v350, 8.507059e+37
        %v352 = vand.u32 %v340, 2147483648
        %v353 = vor.u32 1.1754944e-38, %v352
        %v354 = vsel %vm351, %v353, %v349
        %v355 = vmul.f32 %v330, %v354
        %v356 = vmin.f32 %v355, 1.0
        %v357 = vmax.f32 %v356, -1.0
        %v358 = vadd.f32 %v357, 1.0
        %v359 = vmul.f32 %v316, %v358
        %v360 = vld [vmem:[#allocation7] sm:$0xff]
        %v361 = vld [vmem:[#allocation7 + $0x8] sm:$0xff]
        %v362 = vld [vmem:[#allocation7 + $0x10] sm:$0xff]
        %v363 = vld [vmem:[#allocation7 + $0x18] sm:$0xff]
        %v364 = vld [vmem:[#allocation7 + $0x20] sm:$0xff]
        %v365 = vld [vmem:[#allocation7 + $0x28] sm:$0xff]
        %v366 = vld [vmem:[#allocation7 + $0x30] sm:$0xff]
        %v367 = vld [vmem:[#allocation7 + $0x38] sm:$0xff]
        %v368 = vld [vmem:[#allocation7 + $0x40] sm:$0xff]
        %v369 = vld [vmem:[#allocation7 + $0x48] sm:$0xff]
        %v370 = vld [vmem:[#allocation7 + $0x50] sm:$0xff]
        %v371 = vld [vmem:[#allocation7 + $0x58] sm:$0xff]
        %v372 = vld [vmem:[#allocation7 + $0x60] sm:$0xff]
        %v373 = vld [vmem:[#allocation7 + $0x68] sm:$0xff]
        %v374 = vld [vmem:[#allocation7 + $0x70] sm:$0xff]
        %v375 = vld [vmem:[#allocation7 + $0x78] sm:$0xff]
        %v376 = vld [vmem:[%s4] sm:$0x1]
        %v378 = vperm.slane %v376, 0
        %380 = vmatpush.msra.mxu0 %v375
        %381 = vmatpush.msra.mxu0 %v374
        %382 = vmatpush.msra.mxu0 %v373
        %383 = vmatpush.msra.mxu0 %v372
        %384 = vmatpush.msra.mxu0 %v371
        %385 = vmatpush.msra.mxu0 %v370
        %386 = vmatpush.msra.mxu0 %v369
        %387 = vmatpush.msra.mxu0 %v368
        %388 = vmatpush.msra.mxu0 %v367
        %389 = vmatpush.msra.mxu0 %v366
        %390 = vmatpush.msra.mxu0 %v365
        %391 = vmatpush.msra.mxu0 %v364
        %392 = vmatpush.msra.mxu0 %v363
        %393 = vmatpush.msra.mxu0 %v362
        %394 = vmatpush.msra.mxu0 %v361
        %395 = vmatpush.msra.mxu0 %v360
        %396 = vmatmul.f32.gmra.mxu0 %v359
        %v397 = vpop.f32.mrf.mxu0
        %v398 = vadd.f32 %v378, %v397
        %399 = vdwg.mxu0
        %400 = vst [vmem:[%s274] sm:$0xff] %v398
        %s401 = sand.u32 %s141, 1
        %s402 = scalar_lea.sflag [#allocation4], %s401
        %s403 = sand.u32 %s141, 1
        %s404 = smul.addr %s403, 8
        %s405 = scalar_lea.vmem [#allocation8], %s404
        // Predicated region
        $region53: #{tpu_custom_call.1} parent=39 // pred_check
          %p406 = pneg %p151
        $region54: #{tpu_custom_call.1} parent=39 // pred_check_branch
          %408 = sbr.rel (%p406) target = $region56
        $region55: #{tpu_custom_call.1} parent=39 // pred_region
          %410 = vsyncadd %s402, 0
          %s411 = smul.addr %s23, 8
          %s412 = scalar_lea.hbm %s5, %s411
          %s414 = sshll.u32 %s405, 4
          %s415 = int_to_ptr.vmem [resolvable:$true] %s414
          %s416 = sshll.u32 %s412, 4
          %s417 = int_to_ptr.hbm [resolvable:$true] %s416
          %419 = dma.vmem_to_hbm [thread:$0]  %s415, 128, %s417, %s402
        $region56: #{tpu_custom_call.1} parent=39 // pred_fallthru
          _
      $region40: #{tpu_custom_call.1} parent=5 // pred_fallthru
        _
      %p420 = scmp.le.s32.totalorder 2, %s18
      // Predicated region
      $region57: #{tpu_custom_call.1} parent=5 // pred_check
        %p421 = pneg %p420
      $region58: #{tpu_custom_call.1} parent=5 // pred_check_branch
        %423 = sbr.rel (%p421) target = $region60
      $region59: #{tpu_custom_call.1} parent=5 // pred_region
        %s424 = ssub.s32 %s18, 2
        // Predicated region
        $region61: #{tpu_custom_call.1} parent=59 // pred_check
          %p425 = pneg %p157
        $region62: #{tpu_custom_call.1} parent=59 // pred_check_branch
          %427 = sbr.rel (%p425) target = $region64
        $region63: #{tpu_custom_call.1} parent=59 // pred_region
          %s428 = sand.u32 %s142, 1
          %s429 = scalar_lea.sflag [#allocation4], %s428
          %s430 = sand.u32 %s142, 1
          %s431 = smul.addr %s430, 8
          %s432 = scalar_lea.vmem [#allocation8], %s431
          %434 = dma.done %s429, 128
        $region64: #{tpu_custom_call.1} parent=59 // pred_fallthru
          _
      $region60: #{tpu_custom_call.1} parent=5 // pred_fallthru
        _
    $region6: #{tpu_custom_call.1} parent=1 // loop_footer
      %s22 = sadd.s32 1, %s18
    $region7: #{tpu_custom_call.1} parent=1 // loop_footer_branch
      %17 = sbr.rel target = $region3
    $region8: #{tpu_custom_call.1} parent=1 // loop_exit
      _
    %435 = vsyncpa [#allocation3], 1
    %s436 = scalar_lea.sflag [#allocation3], 1
    %437 = vsyncpa %s436, 1
    %438 = vsyncpa [#allocation6], 1
    %439 = vsyncpa [#allocation4], 1
    %s440 = scalar_lea.sflag [#allocation4], 1
    %441 = vsyncpa %s440, 1

// kernel: tpu_custom_call.1
$region0: #{tpu_custom_call.1}
  #allocation0 [shape = 'u32[]', space=smem, size = 0x4, offset = 0x4, fixed_abs, tag = 'smem constant byte address 0x4 - core index']
  #allocation1 [shape = 'u32[72,128]{1,0:T(1,128)}', space=vmem, size = 0x9000, scoped, tag = 'internal scratch']
  %s0 = inlined_call_operand.hbm [shape: f32[16,128], index: 0, kind: input, shape index: {}]
  %s1 = inlined_call_operand.hbm [shape: f32[128,128], index: 1, kind: input, shape index: {}]
  %s2 = inlined_call_operand.vmem [shape: f32[1,128], index: 2, kind: input, shape index: {}]
  %s3 = inlined_call_operand.hbm [shape: f32[128,128], index: 3, kind: input, shape index: {}]
  %s4 = inlined_call_operand.vmem [shape: f32[1,128], index: 4, kind: input, shape index: {}]
  %s5 = inlined_call_operand.hbm [shape: f32[16,128], index: 5, kind: output, shape index: {}]
  %s6 = sld [smem:[#allocation0]]
  $region65: #{tpu_custom_call.1} parent=0
    _
  %s8 = ssub.s32 1, %s6
  %s9 = scalar_select 0, %s8, %s6
  $region1: #{tpu_custom_call.1} parent=0
    #allocation2 [shape = 'u8[8192]{0}', space=vmem, size = 0x2000, scoped, tag = 'input window, operand 0']
    #allocation3 [shape = 's32[2]{0}', space=sflag, size = 0x8, scoped, tag = 'scoped memory for tpu_custom_call.1']
    #allocation4 [shape = 's32[2]{0}', space=sflag, size = 0x8, scoped, tag = 'scoped memory for tpu_custom_call.1']
    #allocation5 [shape = 'u8[65536]{0}', space=vmem, size = 0x10000, scoped, tag = 'input window, operand 1, single buffered']
    #allocation6 [shape = 's32[1]{0}', space=sflag, size = 0x4, scoped, tag = 'scoped memory for tpu_custom_call.1']
    #allocation7 [shape = 'u8[65536]{0}', space=vmem, size = 0x10000, scoped, tag = 'input window, operand 3, single buffered']
    #allocation8 [shape = 'u8[8192]{0}', space=vmem, size = 0x2000, scoped, tag = 'output window, operand 0']
    %10 = vsyncpa [#allocation3], 0
    %s11 = scalar_lea.sflag [#allocation3], 1
    %12 = vsyncpa %s11, 0
    %13 = vsyncpa [#allocation6], 0
    %14 = vsyncpa [#allocation4], 0
    %s15 = scalar_lea.sflag [#allocation4], 1
    %16 = vsyncpa %s15, 0
    loop: start=0, step=1, limit=4
    $region2: #{tpu_custom_call.1} parent=1 // loop_pre_header
      _
    $region3: #{tpu_custom_call.1} parent=1 // loop_header
      %s18 = sphi 0, %s22
      %p19 = scmp.ge.s32.totalorder %s18, 4
      %s28 = sphi 0, %s30
      %s31 = sphi 0, %s28
      %s32 = sphi 0, %s31
      %s48 = sphi 0, %s32
      %s52 = sphi 0, %s52
      %s54 = sphi 0, %s52
      %s55 = sphi 0, %s54
      %s69 = sphi 0, %s55
      %s73 = sphi 0, %s73
      %s75 = sphi 0, %s73
      %s76 = sphi 0, %s75
      %s90 = sphi 0, %s76
      %s94 = sphi 0, %s94
      %s96 = sphi 0, %s94
      %s97 = sphi 0, %s96
      %s111 = sphi 0, %s97
      %s115 = sphi 0, %s115
      %s117 = sphi 0, %s115
      %s118 = sphi 0, %s117
      %s132 = sphi 0, %s118
      %s138 = sphi 0, %s140
      %s141 = sphi 0, %s138
      %s142 = sphi 0, %s141
      %s158 = sphi 0, %s142
    $region4: #{tpu_custom_call.1} parent=1 // loop_header_branch
      %21 = sbr.rel (%p19) target = $region8
    $region5: #{tpu_custom_call.1} parent=1 // loop_body
      %s23 = ssub.s32 %s18, 1
      %s24 = ssub.s32 %s18, 2
      %s25 = sadd.s32 %s18, 1
      %s26 = ssub.s32 %s18, %s25
      %p27 = scmp.eq.s32.totalorder %s26, 0
      %s29 = sadd.s32 %s28, 1
      %s30 = scalar_select %p27, %s28, %s29
      %p33 = pneg %p27
      %p34 = scmp.eq.s32.totalorder %s18, 1
      %p35 = por %p33, %p34
      %p36 = scmp.ne.s32.totalorder %s28, %s31
      %p37 = scmp.eq.s32.totalorder %s18, 0
      %p38 = por %p36, %p37
      %p39 = scmp.ne.s32.totalorder %s28, %s31
      %p40 = scmp.eq.s32.totalorder %s23, 1
      %p41 = por %p39, %p40
      %p42 = scmp.ne.s32.totalorder %s31, %s32
      %p43 = scmp.eq.s32.totalorder %s23, 0
      %p44 = por %p42, %p43
      %p45 = scmp.ne.s32.totalorder %s31, %s32
      %p46 = scmp.eq.s32.totalorder %s24, 1
      %p47 = por %p45, %p46
      %p49 = scmp.ne.s32.totalorder %s32, %s48
      %p50 = scmp.eq.s32.totalorder %s24, 0
      %p51 = por %p49, %p50
      %s53 = sadd.s32 %s52, 1
      %p56 = scmp.eq.s32.totalorder %s18, 1
      %p57 = scmp.ne.s32.totalorder %s52, %s54
      %p58 = scmp.eq.s32.totalorder %s18, 0
      %p59 = por %p57, %p58
      %p60 = scmp.ne.s32.totalorder %s52, %s54
      %p61 = scmp.eq.s32.totalorder %s23, 1
      %p62 = por %p60, %p61
      %p63 = scmp.ne.s32.totalorder %s54, %s55
      %p64 = scmp.eq.s32.totalorder %s23, 0
      %p65 = por %p63, %p64
      %p66 = scmp.ne.s32.totalorder %s54, %s55
      %p67 = scmp.eq.s32.totalorder %s24, 1
      %p68 = por %p66, %p67
      %p70 = scmp.ne.s32.totalorder %s55, %s69
      %p71 = scmp.eq.s32.totalorder %s24, 0
      %p72 = por %p70, %p71
      %s74 = sadd.s32 %s73, 1
      %p77 = scmp.eq.s32.totalorder %s18, 1
      %p78 = scmp.ne.s32.totalorder %s73, %s75
      %p79 = scmp.eq.s32.totalorder %s18, 0
      %p80 = por %p78, %p79
      %p81 = scmp.ne.s32.totalorder %s73, %s75
      %p82 = scmp.eq.s32.totalorder %s23, 1
      %p83 = por %p81, %p82
      %p84 = scmp.ne.s32.totalorder %s75, %s76
      %p85 = scmp.eq.s32.totalorder %s23, 0
      %p86 = por %p84, %p85
      %p87 = scmp.ne.s32.totalorder %s75, %s76
      %p88 = scmp.eq.s32.totalorder %s24, 1
      %p89 = por %p87, %p88
      %p91 = scmp.ne.s32.totalorder %s76, %s90
      %p92 = scmp.eq.s32.totalorder %s24, 0
      %p93 = por %p91, %p92
      %s95 = sadd.s32 %s94, 1
      %p98 = scmp.eq.s32.totalorder %s18, 1
      %p99 = scmp.ne.s32.totalorder %s94, %s96
      %p100 = scmp.eq.s32.totalorder %s18, 0
      %p101 = por %p99, %p100
      %p102 = scmp.ne.s32.totalorder %s94, %s96
      %p103 = scmp.eq.s32.totalorder %s23, 1
      %p104 = por %p102, %p103
      %p105 = scmp.ne.s32.totalorder %s96, %s97
      %p106 = scmp.eq.s32.totalorder %s23, 0
      %p107 = por %p105, %p106
      %p108 = scmp.ne.s32.totalorder %s96, %s97
      %p109 = scmp.eq.s32.totalorder %s24, 1
      %p110 = por %p108, %p109
      %p112 = scmp.ne.s32.totalorder %s97, %s111
      %p113 = scmp.eq.s32.totalorder %s24, 0
      %p114 = por %p112, %p113
      %s116 = sadd.s32 %s115, 1
      %p119 = scmp.eq.s32.totalorder %s18, 1
      %p120 = scmp.ne.s32.totalorder %s115, %s117
      %p121 = scmp.eq.s32.totalorder %s18, 0
      %p122 = por %p120, %p121
      %p123 = scmp.ne.s32.totalorder %s115, %s117
      %p124 = scmp.eq.s32.totalorder %s23, 1
      %p125 = por %p123, %p124
      %p126 = scmp.ne.s32.totalorder %s117, %s118
      %p127 = scmp.eq.s32.totalorder %s23, 0
      %p128 = por %p126, %p127
      %p129 = scmp.ne.s32.totalorder %s117, %s118
      %p130 = scmp.eq.s32.totalorder %s24, 1
      %p131 = por %p129, %p130
      %p133 = scmp.ne.s32.totalorder %s118, %s132
      %p134 = scmp.eq.s32.totalorder %s24, 0
      %p135 = por %p133, %p134
      %s136 = ssub.s32 %s18, %s25
      %p137 = scmp.eq.s32.totalorder %s136, 0
      %s139 = sadd.s32 %s138, 1
      %s140 = scalar_select %p137, %s138, %s139
      %p143 = pneg %p137
      %p144 = scmp.eq.s32.totalorder %s18, 1
      %p145 = por %p143, %p144
      %p146 = scmp.ne.s32.totalorder %s138, %s141
      %p147 = scmp.eq.s32.totalorder %s18, 0
      %p148 = por %p146, %p147
      %p149 = scmp.ne.s32.totalorder %s138, %s141
      %p150 = scmp.eq.s32.totalorder %s23, 1
      %p151 = por %p149, %p150
      %p152 = scmp.ne.s32.totalorder %s141, %s142
      %p153 = scmp.eq.s32.totalorder %s23, 0
      %p154 = por %p152, %p153
      %p155 = scmp.ne.s32.totalorder %s141, %s142
      %p156 = scmp.eq.s32.totalorder %s24, 1
      %p157 = por %p155, %p156
      %p159 = scmp.ne.s32.totalorder %s142, %s158
      %p160 = scmp.eq.s32.totalorder %s24, 0
      %p161 = por %p159, %p160
      %p162 = scmp.le.s32.totalorder 1, %s18
      %p163 = scmp.lt.s32.totalorder %s18, 3
      %p164 = pnand %p162, %p163
      %p165 = pneg %p164
      // Predicated region
      $region9: #{tpu_custom_call.1} parent=5 // pred_check
        _
      $region10: #{tpu_custom_call.1} parent=5 // pred_check_branch
        %167 = sbr.rel (%p164) target = $region12
      $region11: #{tpu_custom_call.1} parent=5 // pred_region
        %s168 = ssub.s32 %s18, 1
        // Predicated region
        $region13: #{tpu_custom_call.1} parent=11 // pred_check
          %p169 = pneg %p65
        $region14: #{tpu_custom_call.1} parent=11 // pred_check_branch
          %171 = sbr.rel (%p169) target = $region16
        $region15: #{tpu_custom_call.1} parent=11 // pred_region
          %173 = vsyncadd [#allocation6], 0
          %s174 = sshll.u32 %s1, 4
          %s175 = int_to_ptr.hbm [resolvable:$true] %s174
          %s176 = sshll.u32 [#allocation5], 4
          %s177 = int_to_ptr.vmem [resolvable:$true] %s176
          %182 = dma.hbm_to_vmem [thread:$0]  %s175, 2048, %s177, [#allocation6], 128, 128, 8
        $region16: #{tpu_custom_call.1} parent=11 // pred_fallthru
          _
        // Predicated region
        $region17: #{tpu_custom_call.1} parent=11 // pred_check
          %p183 = pneg %p86
        $region18: #{tpu_custom_call.1} parent=11 // pred_check_branch
          %185 = sbr.rel (%p183) target = $region20
        $region19: #{tpu_custom_call.1} parent=11 // pred_region
          _
        $region20: #{tpu_custom_call.1} parent=11 // pred_fallthru
          _
        // Predicated region
        $region21: #{tpu_custom_call.1} parent=11 // pred_check
          %p186 = pneg %p107
        $region22: #{tpu_custom_call.1} parent=11 // pred_check_branch
          %188 = sbr.rel (%p186) target = $region24
        $region23: #{tpu_custom_call.1} parent=11 // pred_region
          %190 = vsyncadd [#allocation6], 0
          %s191 = sshll.u32 %s3, 4
          %s192 = int_to_ptr.hbm [resolvable:$true] %s191
          %s193 = sshll.u32 [#allocation7], 4
          %s194 = int_to_ptr.vmem [resolvable:$true] %s193
          %199 = dma.hbm_to_vmem [thread:$0]  %s192, 2048, %s194, [#allocation6], 128, 128, 8
        $region24: #{tpu_custom_call.1} parent=11 // pred_fallthru
          _
        // Predicated region
        $region25: #{tpu_custom_call.1} parent=11 // pred_check
          %p200 = pneg %p128
        $region26: #{tpu_custom_call.1} parent=11 // pred_check_branch
          %202 = sbr.rel (%p200) target = $region28
        $region27: #{tpu_custom_call.1} parent=11 // pred_region
          _
        $region28: #{tpu_custom_call.1} parent=11 // pred_fallthru
          _
      $region12: #{tpu_custom_call.1} parent=5 // pred_fallthru
        _
      %p203 = scmp.lt.s32.totalorder %s18, 2
      // Predicated region
      $region29: #{tpu_custom_call.1} parent=5 // pred_check
        %p204 = pneg %p203
      $region30: #{tpu_custom_call.1} parent=5 // pred_check_branch
        %206 = sbr.rel (%p204) target = $region32
      $region31: #{tpu_custom_call.1} parent=5 // pred_region
        // Predicated region
        $region33: #{tpu_custom_call.1} parent=31 // pred_check
          %p207 = pneg %p38
        $region34: #{tpu_custom_call.1} parent=31 // pred_check_branch
          %209 = sbr.rel (%p207) target = $region36
        $region35: #{tpu_custom_call.1} parent=31 // pred_region
          %s210 = sand.u32 %s28, 1
          %s211 = scalar_lea.sflag [#allocation3], %s210
          %s212 = sand.u32 %s28, 1
          %s213 = smul.addr %s212, 8
          %s214 = scalar_lea.vmem [#allocation2], %s213
          %216 = vsyncadd %s211, 0
          %s217 = smul.addr %s18, 8
          %s218 = scalar_lea.hbm %s0, %s217
          %s220 = sshll.u32 %s218, 4
          %s221 = int_to_ptr.hbm [resolvable:$true] %s220
          %s222 = sshll.u32 %s214, 4
          %s223 = int_to_ptr.vmem [resolvable:$true] %s222
          %225 = dma.hbm_to_vmem [thread:$0]  %s221, 128, %s223, %s211
        $region36: #{tpu_custom_call.1} parent=31 // pred_fallthru
          _
      $region32: #{tpu_custom_call.1} parent=5 // pred_fallthru
        _
      %p226 = scmp.le.s32.totalorder 1, %s18
      %p227 = scmp.lt.s32.totalorder %s18, 3
      %p228 = pnand %p226, %p227
      %p229 = pneg %p228
      // Predicated region
      $region37: #{tpu_custom_call.1} parent=5 // pred_check
        _
      $region38: #{tpu_custom_call.1} parent=5 // pred_check_branch
        %231 = sbr.rel (%p228) target = $region40
      $region39: #{tpu_custom_call.1} parent=5 // pred_region
        %s232 = ssub.s32 %s18, 1
        %s233 = sand.u32 %s31, 1
        %s234 = scalar_lea.sflag [#allocation3], %s233
        %s235 = sand.u32 %s31, 1
        %s236 = smul.addr %s235, 8
        %s237 = scalar_lea.vmem [#allocation2], %s236
        // Predicated region
        $region41: #{tpu_custom_call.1} parent=39 // pred_check
          %p238 = pneg %p44
        $region42: #{tpu_custom_call.1} parent=39 // pred_check_branch
          %240 = sbr.rel (%p238) target = $region44
        $region43: #{tpu_custom_call.1} parent=39 // pred_region
          %242 = dma.done %s234, 128
        $region44: #{tpu_custom_call.1} parent=39 // pred_fallthru
          _
        // Predicated region
        $region45: #{tpu_custom_call.1} parent=39 // pred_check
          %p243 = pneg %p65
        $region46: #{tpu_custom_call.1} parent=39 // pred_check_branch
          %245 = sbr.rel (%p243) target = $region48
        $region47: #{tpu_custom_call.1} parent=39 // pred_region
          %247 = dma.done [#allocation6], 2048
        $region48: #{tpu_custom_call.1} parent=39 // pred_fallthru
          _
        // Predicated region
        $region49: #{tpu_custom_call.1} parent=39 // pred_check
          %p248 = pneg %p107
        $region50: #{tpu_custom_call.1} parent=39 // pred_check_branch
          %250 = sbr.rel (%p248) target = $region52
        $region51: #{tpu_custom_call.1} parent=39 // pred_region
          %252 = dma.done [#allocation6], 2048
        $region52: #{tpu_custom_call.1} parent=39 // pred_fallthru
          _
        %s253 = sand.u32 %s31, 1
        %s254 = scalar_lea.sflag [#allocation3], %s253
        %s255 = sand.u32 %s31, 1
        %s256 = smul.addr %s255, 8
        %s257 = scalar_lea.vmem [#allocation2], %s256
        %p258 = pneg %p44
        %p259 = pneg %p41
        %p260 = pneg %p65
        %p261 = pneg %p62
        %p262 = pneg %p86
        %p263 = pneg %p83
        %p264 = pneg %p107
        %p265 = pneg %p104
        %p266 = pneg %p128
        %p267 = pneg %p125
        %p268 = pneg %p154
        %p269 = pneg %p151
        %s270 = sand.u32 %s141, 1
        %s271 = scalar_lea.sflag [#allocation4], %s270
        %s272 = sand.u32 %s141, 1
        %s273 = smul.addr %s272, 8
        %s274 = scalar_lea.vmem [#allocation8], %s273
        %v275 = vld [vmem:[%s237] sm:$0xff]
        %v276 = vld [vmem:[#allocation5] sm:$0xff]
        %v277 = vld [vmem:[#allocation5 + $0x8] sm:$0xff]
        %v278 = vld [vmem:[#allocation5 + $0x10] sm:$0xff]
        %v279 = vld [vmem:[#allocation5 + $0x18] sm:$0xff]
        %v280 = vld [vmem:[#allocation5 + $0x20] sm:$0xff]
        %v281 = vld [vmem:[#allocation5 + $0x28] sm:$0xff]
        %v282 = vld [vmem:[#allocation5 + $0x30] sm:$0xff]
        %v283 = vld [vmem:[#allocation5 + $0x38] sm:$0xff]
        %v284 = vld [vmem:[#allocation5 + $0x40] sm:$0xff]
        %v285 = vld [vmem:[#allocation5 + $0x48] sm:$0xff]
        %v286 = vld [vmem:[#allocation5 + $0x50] sm:$0xff]
        %v287 = vld [vmem:[#allocation5 + $0x58] sm:$0xff]
        %v288 = vld [vmem:[#allocation5 + $0x60] sm:$0xff]
        %v289 = vld [vmem:[#allocation5 + $0x68] sm:$0xff]
        %v290 = vld [vmem:[#allocation5 + $0x70] sm:$0xff]
        %v291 = vld [vmem:[#allocation5 + $0x78] sm:$0xff]
        %v292 = vld [vmem:[%s2] sm:$0x1]
        %v294 = vperm.slane %v292, 0
        %296 = vmatpush.msra.mxu0 %v291
        %297 = vmatpush.msra.mxu0 %v290
        %298 = vmatpush.msra.mxu0 %v289
        %299 = vmatpush.msra.mxu0 %v288
        %300 = vmatpush.msra.mxu0 %v287
        %301 = vmatpush.msra.mxu0 %v286
        %302 = vmatpush.msra.mxu0 %v285
        %303 = vmatpush.msra.mxu0 %v284
        %304 = vmatpush.msra.mxu0 %v283
        %305 = vmatpush.msra.mxu0 %v282
        %306 = vmatpush.msra.mxu0 %v281
        %307 = vmatpush.msra.mxu0 %v280
        %308 = vmatpush.msra.mxu0 %v279
        %309 = vmatpush.msra.mxu0 %v278
        %310 = vmatpush.msra.mxu0 %v277
        %311 = vmatpush.msra.mxu0 %v276
        %312 = vmatmul.f32.gmra.mxu0 %v275
        %v313 = vpop.f32.mrf.mxu0
        %v314 = vadd.f32 %v294, %v313
        %315 = vdwg.mxu0
        %v316 = vmul.f32 %v314, 0.5
        %v317 = vmul.f32 %v314, 0.70710677
        %v318 = vmul.f32 %v317, %v317
        %v319 = vmin.f32 16.0, %v318
        %v320 = vmul.f32 %v319, 2.1237322e-06
        %v321 = vadd.f32 %v320, 0.00028619796
        %v322 = vmul.f32 %v319, %v321
        %v323 = vadd.f32 %v322, 0.0036580483
        %v324 = vmul.f32 %v319, %v323
        %v325 = vadd.f32 %v324, 0.05243302
        %v326 = vmul.f32 %v319, %v325
        %v327 = vadd.f32 %v326, 0.18741608
        %v328 = vmul.f32 %v319, %v327
        %v329 = vadd.f32 %v328, 1.1283791
        %v330 = vmul.f32 %v317, %v329
        %v331 = vmul.f32 %v319, 3.8918573e-05
        %v332 = vadd.f32 %v331, 0.001143296
        %v333 = vmul.f32 %v319, %v332
        %v334 = vadd.f32 %v333, 0.014752088
        %v335 = vmul.f32 %v319, %v334
        %v336 = vadd.f32 %v335, 0.112945676
        %v337 = vmul.f32 %v319, %v336
        %v338 = vadd.f32 %v337, 0.4994258
        %v339 = vmul.f32 %v319, %v338
        %v340 = vadd.f32 %v339, 1.0
        %v341 = vrcp.pop %v340
        %v342 = vmul.f32 %v340, %v341
        %v343 = vsub.f32 1.0, %v342
        %v344 = vmul.f32 %v341, %v343
        %v345 = vadd.f32 %v341, %v344
        %vm346 = vweird.f32 %v340
        %vm347 = vweird.f32 %v341
        %vm348 = vmor %vm346, %vm347
        %v349 = vsel %vm348, %v341, %v345
        %v350 = vand.u32 2147483647, %v340
        %vm351 = vcmp.eq.f32.partialorder %v350, 8.507059e+37
        %v352 = vand.u32 %v340, 2147483648
        %v353 = vor.u32 1.1754944e-38, %v352
        %v354 = vsel %vm351, %v353, %v349
        %v355 = vmul.f32 %v330, %v354
        %v356 = vmin.f32 %v355, 1.0
        %v357 = vmax.f32 %v356, -1.0
        %v358 = vadd.f32 %v357, 1.0
        %v359 = vmul.f32 %v316, %v358
        %v360 = vld [vmem:[#allocation7] sm:$0xff]
        %v361 = vld [vmem:[#allocation7 + $0x8] sm:$0xff]
        %v362 = vld [vmem:[#allocation7 + $0x10] sm:$0xff]
        %v363 = vld [vmem:[#allocation7 + $0x18] sm:$0xff]
        %v364 = vld [vmem:[#allocation7 + $0x20] sm:$0xff]
        %v365 = vld [vmem:[#allocation7 + $0x28] sm:$0xff]
        %v366 = vld [vmem:[#allocation7 + $0x30] sm:$0xff]
        %v367 = vld [vmem:[#allocation7 + $0x38] sm:$0xff]
        %v368 = vld [vmem:[#allocation7 + $0x40] sm:$0xff]
        %v369 = vld [vmem:[#allocation7 + $0x48] sm:$0xff]
        %v370 = vld [vmem:[#allocation7 + $0x50] sm:$0xff]
        %v371 = vld [vmem:[#allocation7 + $0x58] sm:$0xff]
        %v372 = vld [vmem:[#allocation7 + $0x60] sm:$0xff]
        %v373 = vld [vmem:[#allocation7 + $0x68] sm:$0xff]
        %v374 = vld [vmem:[#allocation7 + $0x70] sm:$0xff]
        %v375 = vld [vmem:[#allocation7 + $0x78] sm:$0xff]
        %v376 = vld [vmem:[%s4] sm:$0x1]
        %v378 = vperm.slane %v376, 0
        %380 = vmatpush.msra.mxu0 %v375
        %381 = vmatpush.msra.mxu0 %v374
        %382 = vmatpush.msra.mxu0 %v373
        %383 = vmatpush.msra.mxu0 %v372
        %384 = vmatpush.msra.mxu0 %v371
        %385 = vmatpush.msra.mxu0 %v370
        %386 = vmatpush.msra.mxu0 %v369
        %387 = vmatpush.msra.mxu0 %v368
        %388 = vmatpush.msra.mxu0 %v367
        %389 = vmatpush.msra.mxu0 %v366
        %390 = vmatpush.msra.mxu0 %v365
        %391 = vmatpush.msra.mxu0 %v364
        %392 = vmatpush.msra.mxu0 %v363
        %393 = vmatpush.msra.mxu0 %v362
        %394 = vmatpush.msra.mxu0 %v361
        %395 = vmatpush.msra.mxu0 %v360
        %396 = vmatmul.f32.gmra.mxu0 %v359
        %v397 = vpop.f32.mrf.mxu0
        %v398 = vadd.f32 %v378, %v397
        %399 = vdwg.mxu0
        %400 = vst [vmem:[%s274] sm:$0xff] %v398
        %s401 = sand.u32 %s141, 1
        %s402 = scalar_lea.sflag [#allocation4], %s401
        %s403 = sand.u32 %s141, 1
        %s404 = smul.addr %s403, 8
        %s405 = scalar_lea.vmem [#allocation8], %s404
        // Predicated region
        $region53: #{tpu_custom_call.1} parent=39 // pred_check
          %p406 = pneg %p151
        $region54: #{tpu_custom_call.1} parent=39 // pred_check_branch
          %408 = sbr.rel (%p406) target = $region56
        $region55: #{tpu_custom_call.1} parent=39 // pred_region
          %410 = vsyncadd %s402, 0
          %s411 = smul.addr %s23, 8
          %s412 = scalar_lea.hbm %s5, %s411
          %s414 = sshll.u32 %s405, 4
          %s415 = int_to_ptr.vmem [resolvable:$true] %s414
          %s416 = sshll.u32 %s412, 4
          %s417 = int_to_ptr.hbm [resolvable:$true] %s416
          %419 = dma.vmem_to_hbm [thread:$0]  %s415, 128, %s417, %s402
        $region56: #{tpu_custom_call.1} parent=39 // pred_fallthru
          _
      $region40: #{tpu_custom_call.1} parent=5 // pred_fallthru
        _
      %p420 = scmp.le.s32.totalorder 2, %s18
      // Predicated region
      $region57: #{tpu_custom_call.1} parent=5 // pred_check
        %p421 = pneg %p420
      $region58: #{tpu_custom_call.1} parent=5 // pred_check_branch
        %423 = sbr.rel (%p421) target = $region60
      $region59: #{tpu_custom_call.1} parent=5 // pred_region
        %s424 = ssub.s32 %s18, 2
        // Predicated region
        $region61: #{tpu_custom_call.1} parent=59 // pred_check
          %p425 = pneg %p157
        $region62: #{tpu_custom_call.1} parent=59 // pred_check_branch
          %427 = sbr.rel (%p425) target = $region64
        $region63: #{tpu_custom_call.1} parent=59 // pred_region
          %s428 = sand.u32 %s142, 1
          %s429 = scalar_lea.sflag [#allocation4], %s428
          %s430 = sand.u32 %s142, 1
          %s431 = smul.addr %s430, 8
          %s432 = scalar_lea.vmem [#allocation8], %s431
          %434 = dma.done %s429, 128
        $region64: #{tpu_custom_call.1} parent=59 // pred_fallthru
          _
      $region60: #{tpu_custom_call.1} parent=5 // pred_fallthru
        _
    $region6: #{tpu_custom_call.1} parent=1 // loop_footer
      %s22 = sadd.s32 1, %s18
    $region7: #{tpu_custom_call.1} parent=1 // loop_footer_branch
      %17 = sbr.rel target = $region3
    $region8: #{tpu_custom_call.1} parent=1 // loop_exit
      _
    %435 = vsyncpa [#allocation3], 1
    %s436 = scalar_lea.sflag [#allocation3], 1
    %437 = vsyncpa %s436, 1
    %438 = vsyncpa [#allocation6], 1
    %439 = vsyncpa [#allocation4], 1
    %s440 = scalar_lea.sflag [#allocation4], 1
    %441 = vsyncpa %s440, 1

</llo_original>
